<compile_context>
chip_gen: v7x
topology: tpu7x:2x2x1
jax: 0.10.0
libtpu: 0.0.40
codegen_flags: <defaults>
</compile_context>

<pallas_src>
import functools

import jax
import jax.numpy as jnp
from jax import lax
from jax.experimental import pallas as pl
from jax.experimental.pallas import tpu as pltpu


def _chip_budgets():
    """Per-generation DMA-block / VMEM budgets.

    Falls back to conservative defaults when not on a TPU (e.g. interpret mode on CPU).
    """
    vmem_cap = None
    kind = ""
    try:
        info = pltpu.get_tpu_info()
        vmem_cap = int(getattr(info, "vmem_capacity_bytes", 0)) or None
    except Exception:
        vmem_cap = None
    try:
        kind = jax.devices()[0].device_kind.lower()
    except Exception:
        kind = ""

    is_v7 = (vmem_cap is not None and vmem_cap <= (64 << 20)) or ("v7" in kind)
    if is_v7:
        # v7x: half the VMEM (64 MiB) but ~2.2x HBM BW and 2 TensorCores.
        return dict(block_target=6 << 20, vmem_limit=44 << 20, want_two_grid_points=True)
    if "v6" in kind:
        # v6e: 128 MiB physical VMEM, single TC -> big blocks.
        return dict(block_target=12 << 20, vmem_limit=64 << 20, want_two_grid_points=False)
    # v5e (16 MiB scoped default -> keep the limit explicit) or unknown backend.
    return dict(block_target=8 << 20, vmem_limit=48 << 20, want_two_grid_points=False)


def _gradient_filter_kernel(x_ref, *rest, p_norm, th, w, num_h_tiles, has_halo, halo_rows):
    """One grid step: NB images x one H-tile of TH rows.

    x_ref : (NB, 3, TH, W)            input tile
    top_ref / bot_ref (only when has_halo): (NB, 3, halo_rows, W) halo blocks; the row
        adjacent to this tile is their last / first row.  Their index_map is clamped at the
        image border; at the border the kernel replicates rows of the tile itself instead.
    o_ref : (NB, 1, TH, W)            output tile
    """
    if has_halo:
        top_ref, bot_ref, o_ref = rest
    else:
        (o_ref,) = rest

    f32 = jnp.float32

    def csum(ref, sl):
        return (ref[:, 0, sl, :].astype(f32)
                + ref[:, 1, sl, :].astype(f32)
                + ref[:, 2, sl, :].astype(f32))

    def p_pow(v):
        if p_norm == 2.0:
            return v * v
        if p_norm == 1.0:
            return jnp.abs(v)
        return jnp.abs(v) ** p_norm

    # ---- sum the 3 channels first (f32 accumulation), then shift the single slab ----
    s = csum(x_ref, slice(None))                                 # (NB, TH, W)

    # ---- gx: central difference along H with replicate edges; fold into accumulator ----
    if has_halo:
        t = pl.program_id(1)
        above_h = csum(top_ref, slice(halo_rows - 1, halo_rows))  # row t*TH - 1
        below_h = csum(bot_ref, slice(0, 1))                      # row (t+1)*TH
        above = jnp.where(t == 0, s[:, 0:1, :], above_h)                      # top edge
        below = jnp.where(t == num_h_tiles - 1, s[:, th - 1:th, :], below_h)  # bottom edge
    else:
        above = s[:, 0:1, :]
        below = s[:, th - 1:th, :]
    gx = (jnp.concatenate([s[:, 1:th, :], below], axis=1)         # s[h+1]
          - jnp.concatenate([above, s[:, 0:th - 1, :]], axis=1))  # s[h-1]
    acc = p_pow(gx)
    del gx

    # ---- gy: central difference along W with replicate edges; fold into accumulator ----
    if w % 128 == 0:
        # Lane-dense width: rotate on the XLU (off the vload/VPU critical path), then fix
        # the two wrapped edge columns explicitly.  NOTE: axis must be non-negative.
        col_m1 = pltpu.roll(s, shift=1, axis=2)          # s[w-1] in the interior
        col_p1 = pltpu.roll(s, shift=w - 1, axis=2)      # s[w+1] in the interior
        d = col_p1 - col_m1
        lane = lax.broadcasted_iota(jnp.int32, s.shape, 2)
        gy = jnp.where(lane == 0, s[:, :, 1:2] - s[:, :, 0:1],
             jnp.where(lane == w - 1, s[:, :, w - 1:w] - s[:, :, w - 2:w - 1], d))
    else:
        # tiny / unaligned widths: plain replicate-edge slabs
        gy = (jnp.concatenate([s[:, :, 1:w], s[:, :, w - 1:w]], axis=2)
              - jnp.concatenate([s[:, :, 0:1], s[:, :, 0:w - 1]], axis=2))
    acc = acc + p_pow(gy)
    del gy

    # ---- finalize p-norm; the common 1/3 filter scale is applied once at the very end ----
    if p_norm == 2.0:
        nrm = jnp.sqrt(acc)
    elif p_norm == 1.0:
        nrm = acc
    else:
        nrm = acc ** (1.0 / p_norm)
    o_ref[:, 0, :, :] = (nrm * f32(1.0 / 3.0)).astype(o_ref.dtype)


def gradient_filter(x, p_norm=2.0, *, tile_h=None, batch_block=None, block_bytes=None):
    """x: (N, 3, H, W) NCHW. Returns (N, 1, H, W), same dtype as x."""
    N, C, H, W = x.shape
    assert C == 3, "GradientFilter expects 3 input channels"
    itemsize = jnp.dtype(x.dtype).itemsize
    sub = {1: 32, 2: 16, 4: 8}.get(itemsize, 8)   # min sublane tile (dtype-dependent)

    budget = _chip_budgets()
    target = int(block_bytes) if block_bytes is not None else budget["block_target"]

    # ---- H tile: multiple of `sub` dividing H, keeping a block near the chip's target ----
    if tile_h is not None:
        TH = int(tile_h)
        assert H % TH == 0 and (TH == H or (TH % sub == 0 and H % sub == 0))
    else:
        TH = H
        if H % sub == 0 and 3 * H * W * itemsize > target:
            cands = [t for t in range(sub, H + 1, sub)
                     if H % t == 0 and 3 * t * W * itemsize <= target]
            if cands:
                TH = max(cands)

    # ---- images per grid step: aim for ~target bytes of input per step ----
    per_img = 3 * TH * W * itemsize
    divs = [d for d in range(1, N + 1) if N % d == 0]
    if batch_block is not None:
        NB = int(batch_block)
        assert N % NB == 0
    else:
        NB = max([d for d in divs if d * per_img <= target] or [1])

    num_h_tiles = H // TH
    # v7x only: both TensorCores need work; prefer splitting H (keeps block bytes) over
    # shrinking the per-step image batch.
    if budget["want_two_grid_points"] and (N // NB) * num_h_tiles < 2:
        if tile_h is None and H % sub == 0:
            smaller = [t for t in range(sub, TH, sub) if H % t == 0]
            if smaller:
                TH = max(smaller)
                num_h_tiles = H // TH
        if (N // NB) * num_h_tiles < 2 and batch_block is None and NB > 1:
            NB = max(d for d in divs if d < NB)

    has_halo = num_h_tiles > 1
    n_blocks = N // NB
    grid = (n_blocks, num_h_tiles)

    kernel = functools.partial(
        _gradient_filter_kernel, p_norm=float(p_norm), th=TH, w=W,
        num_h_tiles=num_h_tiles, has_halo=has_halo, halo_rows=sub)

    in_specs = [pl.BlockSpec((NB, 3, TH, W), lambda n, t: (n, 0, t, 0))]
    operands = [x]
    if has_halo:
        k = TH // sub                  # H-tile size in halo blocks
        last_blk = H // sub - 1
        # `sub`-row halo blocks above / below this tile; clamped at the image border.
        in_specs.append(pl.BlockSpec(
            (NB, 3, sub, W), lambda n, t: (n, 0, jnp.maximum(t * k - 1, 0), 0)))
        in_specs.append(pl.BlockSpec(
            (NB, 3, sub, W), lambda n, t: (n, 0, jnp.minimum((t + 1) * k, last_blk), 0)))
        operands += [x, x]

    return pl.pallas_call(
        kernel,
        out_shape=jax.ShapeDtypeStruct((N, 1, H, W), x.dtype),
        grid=grid,
        in_specs=in_specs,
        out_specs=pl.BlockSpec((NB, 1, TH, W), lambda n, t: (n, 0, t, 0)),
        compiler_params=pltpu.CompilerParams(
            dimension_semantics=("parallel", "parallel"),
            vmem_limit_bytes=budget["vmem_limit"],
        ),
    )(*operands)


def _gradient_filter_ref(x, p_norm=2.0):
    """Pure-JAX reference mirroring the PyTorch forward."""
    x_pad = jnp.pad(x, ((0, 0), (0, 0), (1, 1), (1, 1)), mode="edge")
    H, W = x.shape[2], x.shape[3]
    gx = (x_pad[:, :, 2:H + 2, 1:W + 1] - x_pad[:, :, 0:H, 1:W + 1]).sum(axis=1) / 3.0
    gy = (x_pad[:, :, 1:H + 1, 2:W + 2] - x_pad[:, :, 1:H + 1, 0:W]).sum(axis=1) / 3.0
    g = jnp.stack([gx, gy], axis=1)
    return jnp.sum(jnp.abs(g) ** p_norm, axis=1, keepdims=True) ** (1.0 / p_norm)


if __name__ == "__main__":
    key = jax.random.PRNGKey(0)
    k1, k2, k3 = jax.random.split(key, 3)

    # 1) Small image: default heuristics (single tile on 1-TC chips, auto H-split on v7x).
    x1 = jax.random.normal(k1, (2, 3, 16, 16), dtype=jnp.float32)
    out1 = jax.block_until_ready(gradient_filter(x1, p_norm=2.0))
    ref1 = _gradient_filter_ref(x1, p_norm=2.0)
    assert out1.shape == (2, 1, 16, 16), out1.shape
    assert jnp.allclose(out1, ref1, atol=1e-5, rtol=1e-5), float(jnp.max(jnp.abs(out1 - ref1)))

    # 2) Force the H-tiled (halo) path and the lane-dense (W=128) pltpu.roll path.
    x2 = jax.random.normal(k2, (2, 3, 64, 128), dtype=jnp.float32)
    out2 = jax.block_until_ready(gradient_filter(x2, p_norm=2.0, tile_h=16, batch_block=1))
    ref2 = _gradient_filter_ref(x2, p_norm=2.0)
    assert jnp.allclose(out2, ref2, atol=1e-5, rtol=1e-5), float(jnp.max(jnp.abs(out2 - ref2)))

    # 3) p = 1 branch.
    out3 = jax.block_until_ready(gradient_filter(x1, p_norm=1.0))
    ref3 = _gradient_filter_ref(x1, p_norm=1.0)
    assert jnp.allclose(out3, ref3, atol=1e-5, rtol=1e-5), float(jnp.max(jnp.abs(out3 - ref3)))

    # 4) bf16 input: dtype-dependent (16-row) halo blocks + tiled H + roll path.
    x4 = jax.random.normal(k3, (2, 3, 32, 128), dtype=jnp.float32).astype(jnp.bfloat16)
    out4 = jax.block_until_ready(gradient_filter(x4, p_norm=2.0, tile_h=16, batch_block=1))
    ref4 = _gradient_filter_ref(x4.astype(jnp.float32), p_norm=2.0)
    assert out4.dtype == jnp.bfloat16
    assert jnp.allclose(out4.astype(jnp.float32), ref4, atol=2e-2, rtol=2e-2), \
        float(jnp.max(jnp.abs(out4.astype(jnp.float32) - ref4)))

    print("KERNEL_OK")
</pallas_src>

<mosaic_0001>
module attributes {stable_mosaic.version = 11 : i64} {
  func.func @_gradient_filter_kernel(%arg0: i32, %arg1: i32, %arg2: memref<2x3x16x16xf32, #tpu.memory_space<vmem>>, %arg3: memref<2x1x16x16xf32, #tpu.memory_space<vmem>>) attributes {dimension_semantics = [#tpu.dimension_semantics<parallel>, #tpu.dimension_semantics<parallel>], iteration_bounds = array<i64: 1, 1>, scalar_prefetch = 0 : i64, scratch_operands = 0 : i64, tpu.core_type = #tpu.core_type<tc>, window_params = [{transform_indices = @transform_0, window_bounds = array<i64: 2, 3, 16, 16>}, {transform_indices = @transform_1, window_bounds = array<i64: 2, 1, 16, 16>}]} {
    %c0 = arith.constant 0 : index
    %c0_0 = arith.constant 0 : index
    %c0_1 = arith.constant 0 : index
    %c0_2 = arith.constant 0 : index
    %0 = vector.load %arg2[%c0, %c0_0, %c0_1, %c0_2] : memref<2x3x16x16xf32, #tpu.memory_space<vmem>>, vector<2x1x16x16xf32>
    %1 = vector.shape_cast %0 : vector<2x1x16x16xf32> to vector<2x16x16xf32>
    %c0_3 = arith.constant 0 : index
    %c1 = arith.constant 1 : index
    %c0_4 = arith.constant 0 : index
    %c0_5 = arith.constant 0 : index
    %2 = vector.load %arg2[%c0_3, %c1, %c0_4, %c0_5] : memref<2x3x16x16xf32, #tpu.memory_space<vmem>>, vector<2x1x16x16xf32>
    %3 = vector.shape_cast %2 : vector<2x1x16x16xf32> to vector<2x16x16xf32>
    %4 = arith.addf %1, %3 : vector<2x16x16xf32>
    %c0_6 = arith.constant 0 : index
    %c2 = arith.constant 2 : index
    %c0_7 = arith.constant 0 : index
    %c0_8 = arith.constant 0 : index
    %5 = vector.load %arg2[%c0_6, %c2, %c0_7, %c0_8] : memref<2x3x16x16xf32, #tpu.memory_space<vmem>>, vector<2x1x16x16xf32>
    %6 = vector.shape_cast %5 : vector<2x1x16x16xf32> to vector<2x16x16xf32>
    %7 = arith.addf %4, %6 : vector<2x16x16xf32>
    %8 = vector.extract_strided_slice %7 {offsets = [0, 0, 0], sizes = [2, 1, 16], strides = [1, 1, 1]} : vector<2x16x16xf32> to vector<2x1x16xf32>
    %9 = vector.extract_strided_slice %7 {offsets = [0, 15, 0], sizes = [2, 1, 16], strides = [1, 1, 1]} : vector<2x16x16xf32> to vector<2x1x16xf32>
    %10 = vector.extract_strided_slice %7 {offsets = [0, 1, 0], sizes = [2, 15, 16], strides = [1, 1, 1]} : vector<2x16x16xf32> to vector<2x15x16xf32>
    %11 = tpu.concatenate %10, %9 in 1 : vector<2x15x16xf32>, vector<2x1x16xf32> -> vector<2x16x16xf32>
    %12 = vector.extract_strided_slice %7 {offsets = [0, 0, 0], sizes = [2, 15, 16], strides = [1, 1, 1]} : vector<2x16x16xf32> to vector<2x15x16xf32>
    %13 = tpu.concatenate %8, %12 in 1 : vector<2x1x16xf32>, vector<2x15x16xf32> -> vector<2x16x16xf32>
    %14 = arith.subf %11, %13 : vector<2x16x16xf32>
    %15 = arith.mulf %14, %14 : vector<2x16x16xf32>
    %16 = vector.extract_strided_slice %7 {offsets = [0, 0, 1], sizes = [2, 16, 15], strides = [1, 1, 1]} : vector<2x16x16xf32> to vector<2x16x15xf32>
    %17 = vector.extract_strided_slice %7 {offsets = [0, 0, 15], sizes = [2, 16, 1], strides = [1, 1, 1]} : vector<2x16x16xf32> to vector<2x16x1xf32>
    %18 = tpu.concatenate %16, %17 in 2 : vector<2x16x15xf32>, vector<2x16x1xf32> -> vector<2x16x16xf32>
    %19 = vector.extract_strided_slice %7 {offsets = [0, 0, 0], sizes = [2, 16, 1], strides = [1, 1, 1]} : vector<2x16x16xf32> to vector<2x16x1xf32>
    %20 = vector.extract_strided_slice %7 {offsets = [0, 0, 0], sizes = [2, 16, 15], strides = [1, 1, 1]} : vector<2x16x16xf32> to vector<2x16x15xf32>
    %21 = tpu.concatenate %19, %20 in 2 : vector<2x16x1xf32>, vector<2x16x15xf32> -> vector<2x16x16xf32>
    %22 = arith.subf %18, %21 : vector<2x16x16xf32>
    %23 = arith.mulf %22, %22 : vector<2x16x16xf32>
    %24 = arith.addf %15, %23 : vector<2x16x16xf32>
    %25 = math.sqrt %24 : vector<2x16x16xf32>
    %cst = arith.constant 0.333333343 : f32
    %26 = vector.broadcast %cst : f32 to vector<2x16x16xf32>
    %27 = arith.mulf %25, %26 : vector<2x16x16xf32>
    %c0_9 = arith.constant 0 : index
    %c0_10 = arith.constant 0 : index
    %c0_11 = arith.constant 0 : index
    %c0_12 = arith.constant 0 : index
    %28 = vector.load %arg3[%c0_9, %c0_10, %c0_11, %c0_12] : memref<2x1x16x16xf32, #tpu.memory_space<vmem>>, vector<2x1x16x16xf32>
    %29 = vector.shape_cast %28 : vector<2x1x16x16xf32> to vector<2x16x16xf32>
    %30 = vector.shape_cast %27 : vector<2x16x16xf32> to vector<2x1x16x16xf32>
    tpu.vector_store %arg3[%c0_9, %c0_10, %c0_11, %c0_12], %30 {strides = array<i32>} : memref<2x1x16x16xf32, #tpu.memory_space<vmem>>, vector<2x1x16x16xf32>,
    return
  }
  func.func @transform_0(%arg0: i32, %arg1: i32) -> (i32, i32, i32, i32) {
    %c0_i32 = arith.constant 0 : i32
    %c0_i32_0 = arith.constant 0 : i32
    %c0_i32_1 = arith.constant 0 : i32
    return %arg0, %c0_i32, %arg1, %c0_i32_0 : i32, i32, i32, i32
  }
  func.func @transform_1(%arg0: i32, %arg1: i32) -> (i32, i32, i32, i32) {
    %c0_i32 = arith.constant 0 : i32
    %c0_i32_0 = arith.constant 0 : i32
    %c0_i32_1 = arith.constant 0 : i32
    return %arg0, %c0_i32, %arg1, %c0_i32_0 : i32, i32, i32, i32
  }
}

</mosaic_0001>

<llo_original>
// kernel: tpu_custom_call.1
$region0: #{tpu_custom_call.1}
  #allocation0 [shape = 'u32[]', space=smem, size = 0x4, offset = 0x4, fixed_abs, tag = 'smem constant byte address 0x4 - core index']
  #allocation1 [shape = 'u32[144,128]{1,0:T(1,128)}', space=vmem, size = 0x12000, scoped, tag = 'internal scratch']
  %s0 = inlined_call_operand.hbm [shape: f32[2,3,16,16], index: 0, kind: input, shape index: {}]
  %s1 = inlined_call_operand.hbm [shape: f32[2,1,16,16], index: 1, kind: output, shape index: {}]
  %s2 = sld [smem:[#allocation0]]
  $region18: #{tpu_custom_call.1} parent=0
    _
  %s4 = ssub.s32 1, %s2
  %s5 = scalar_select 0, %s4, %s2
  $region1: #{tpu_custom_call.1} parent=0
    #allocation2 [shape = 'u8[49152]{0}', space=vmem, size = 0xc000, scoped, tag = 'input window, operand 0, single buffered']
    #allocation3 [shape = 's32[1]{0}', space=sflag, size = 0x4, scoped, tag = 'scoped memory for tpu_custom_call.1']
    #allocation4 [shape = 's32[1]{0}', space=sflag, size = 0x4, scoped, tag = 'scoped memory for tpu_custom_call.1']
    #allocation5 [shape = 'u8[16384]{0}', space=vmem, size = 0x4000, scoped, tag = 'output window, operand 0, single buffered']
    %6 = vsyncpa [#allocation3], 0
    %7 = vsyncpa [#allocation4], 0
    // Predicated region
    $region2: #{tpu_custom_call.1} parent=1 // pred_check
      _
    $region3: #{tpu_custom_call.1} parent=1 // pred_check_branch
      %9 = sbr.rel (0) target = $region5
    $region4: #{tpu_custom_call.1} parent=1 // pred_region
      %s11 = ssub.s32 1536, 1536
      %12 = vsyncadd [#allocation3], %s11
      %s13 = sshll.u32 [#allocation2], 4
      %s14 = int_to_ptr.vmem [resolvable:$true] %s13
      %19 = dma.hbm_to_vmem [thread:$0]  %s0, 1536, %s14, [#allocation3], 128, 128, 8
    $region5: #{tpu_custom_call.1} parent=1 // pred_fallthru
      _
    // Predicated region
    $region6: #{tpu_custom_call.1} parent=1 // pred_check
      _
    $region7: #{tpu_custom_call.1} parent=1 // pred_check_branch
      %21 = sbr.rel (0) target = $region9
    $region8: #{tpu_custom_call.1} parent=1 // pred_region
      %22 = dma.done [#allocation3], 1536
    $region9: #{tpu_custom_call.1} parent=1 // pred_fallthru
      _
    %v23 = vld [vmem:[#allocation2] sm:$0xff]
    %v24 = vld [vmem:[#allocation2 + $0x8] sm:$0xff]
    %v25 = vld [vmem:[#allocation2 + $0x30] sm:$0xff]
    %v26 = vld [vmem:[#allocation2 + $0x38] sm:$0xff]
    %s27 = scalar_lea.vmem [#allocation2], 16
    %v28 = vld [vmem:[%s27] sm:$0xff]
    %v29 = vld [vmem:[%s27 + $0x8] sm:$0xff]
    %v30 = vld [vmem:[%s27 + $0x30] sm:$0xff]
    %v31 = vld [vmem:[%s27 + $0x38] sm:$0xff]
    %v32 = vadd.f32 %v23, %v28
    %v33 = vadd.f32 %v24, %v29
    %v34 = vadd.f32 %v25, %v30
    %v35 = vadd.f32 %v26, %v31
    %s36 = scalar_lea.vmem [#allocation2], 32
    %v37 = vld [vmem:[%s36] sm:$0xff]
    %v38 = vld [vmem:[%s36 + $0x8] sm:$0xff]
    %v39 = vld [vmem:[%s36 + $0x30] sm:$0xff]
    %v40 = vld [vmem:[%s36 + $0x38] sm:$0xff]
    %v41 = vadd.f32 %v32, %v37
    %v42 = vadd.f32 %v33, %v38
    %v43 = vadd.f32 %v34, %v39
    %v44 = vadd.f32 %v35, %v40
    %vm49 = vcmask 1046528
    %v50 = vrot.slane %v41, 1
    %v51 = vrot.slane %v42, 1
    %v52 = vsel %vm49, %v50, %v51
    %v53 = vrot.slane %v43, 1
    %v54 = vrot.slane %v44, 1
    %v55 = vsel %vm49, %v53, %v54
    %v60 = vsel %vm49, %v51, %v42
    %v61 = vsel %vm49, %v54, %v44
    %vm62 = vcmask 1040384
    %v63 = vrot.slane %v41, 7
    %v64 = vrot.slane %v42, 7
    %v65 = vsel %vm62, %v63, %v64
    %v66 = vrot.slane %v43, 7
    %v67 = vrot.slane %v44, 7
    %v68 = vsel %vm62, %v66, %v67
    %v73 = vsel %vm62, %v41, %v63
    %v74 = vsel %vm62, %v43, %v66
    %v75 = vsub.f32 %v52, %v73
    %v76 = vsub.f32 %v60, %v65
    %v77 = vsub.f32 %v55, %v74
    %v78 = vsub.f32 %v61, %v68
    %v79 = vmul.f32 %v75, %v75
    %v80 = vmul.f32 %v76, %v76
    %v81 = vmul.f32 %v77, %v77
    %v82 = vmul.f32 %v78, %v78
    %83 = vrot.lane.b32.xlu0 %v41, 127
    %v84 = vpop.permute.xlu0 %83
    %85 = vrot.lane.b32.xlu0 %v42, 127
    %v86 = vpop.permute.xlu0 %85
    %87 = vrot.lane.b32.xlu0 %v43, 127
    %v88 = vpop.permute.xlu0 %87
    %89 = vrot.lane.b32.xlu0 %v44, 127
    %v90 = vpop.permute.xlu0 %89
    %vm95 = vcmask 121856
    %v96 = vsel %vm95, %v84, %v41
    %v97 = vsel %vm95, %v86, %v42
    %v98 = vsel %vm95, %v88, %v43
    %v99 = vsel %vm95, %v90, %v44
    %100 = vrot.lane.b32.xlu0 %v41, 1
    %v101 = vpop.permute.xlu0 %100
    %102 = vrot.lane.b32.xlu0 %v42, 1
    %v103 = vpop.permute.xlu0 %102
    %104 = vrot.lane.b32.xlu0 %v43, 1
    %v105 = vpop.permute.xlu0 %104
    %106 = vrot.lane.b32.xlu0 %v44, 1
    %v107 = vpop.permute.xlu0 %106
    %vm112 = vcmask 7168
    %v113 = vsel %vm112, %v41, %v101
    %v114 = vsel %vm112, %v42, %v103
    %v115 = vsel %vm112, %v43, %v105
    %v116 = vsel %vm112, %v44, %v107
    %v117 = vsub.f32 %v96, %v113
    %v118 = vsub.f32 %v97, %v114
    %v119 = vsub.f32 %v98, %v115
    %v120 = vsub.f32 %v99, %v116
    %v121 = vmul.f32 %v117, %v117
    %v122 = vmul.f32 %v118, %v118
    %v123 = vmul.f32 %v119, %v119
    %v124 = vmul.f32 %v120, %v120
    %v125 = vadd.f32 %v79, %v121
    %v126 = vadd.f32 %v80, %v122
    %v127 = vadd.f32 %v81, %v123
    %v128 = vadd.f32 %v82, %v124
    %v129 = vrsqrt.pop %v125
    %v130 = vmul.f32 %v125, %v129
    %vm131 = vcmp.eq.f32.partialorder %v125, inf
    %v132 = vsel %vm131, %v125, %v130
    %vm133 = vcmp.eq.f32.partialorder %v125, 0.0
    %v134 = vand.u32 %v125, 2147483648
    %v135 = vsel %vm133, %v134, %v132
    %v136 = vrsqrt.pop %v126
    %v137 = vmul.f32 %v126, %v136
    %vm138 = vcmp.eq.f32.partialorder %v126, inf
    %v139 = vsel %vm138, %v126, %v137
    %vm140 = vcmp.eq.f32.partialorder %v126, 0.0
    %v141 = vand.u32 %v126, 2147483648
    %v142 = vsel %vm140, %v141, %v139
    %v143 = vrsqrt.pop %v127
    %v144 = vmul.f32 %v127, %v143
    %vm145 = vcmp.eq.f32.partialorder %v127, inf
    %v146 = vsel %vm145, %v127, %v144
    %vm147 = vcmp.eq.f32.partialorder %v127, 0.0
    %v148 = vand.u32 %v127, 2147483648
    %v149 = vsel %vm147, %v148, %v146
    %v150 = vrsqrt.pop %v128
    %v151 = vmul.f32 %v128, %v150
    %vm152 = vcmp.eq.f32.partialorder %v128, inf
    %v153 = vsel %vm152, %v128, %v151
    %vm154 = vcmp.eq.f32.partialorder %v128, 0.0
    %v155 = vand.u32 %v128, 2147483648
    %v156 = vsel %vm154, %v155, %v153
    %v157 = vmul.f32 %v135, 0.33333334
    %v158 = vmul.f32 %v142, 0.33333334
    %v159 = vmul.f32 %v149, 0.33333334
    %v160 = vmul.f32 %v156, 0.33333334
    %vm161 = vcmask 130048
    %162 = vst.msk [vmem:[#allocation5] sm:$0xff] %vm161, %v157
    %163 = vst.msk [vmem:[#allocation5 + $0x8] sm:$0xff] %vm161, %v158
    %164 = vst.msk [vmem:[#allocation5 + $0x10] sm:$0xff] %vm161, %v159
    %165 = vst.msk [vmem:[#allocation5 + $0x18] sm:$0xff] %vm161, %v160
    // Predicated region
    $region10: #{tpu_custom_call.1} parent=1 // pred_check
      _
    $region11: #{tpu_custom_call.1} parent=1 // pred_check_branch
      %167 = sbr.rel (0) target = $region13
    $region12: #{tpu_custom_call.1} parent=1 // pred_region
      %s169 = ssub.s32 512, 512
      %170 = vsyncadd [#allocation4], %s169
      %s171 = sshll.u32 [#allocation5], 4
      %s172 = int_to_ptr.vmem [resolvable:$true] %s171
      %177 = dma.vmem_to_hbm [thread:$0]  %s172, 512, %s1, [#allocation4], 128, 128, 8
    $region13: #{tpu_custom_call.1} parent=1 // pred_fallthru
      _
    // Predicated region
    $region14: #{tpu_custom_call.1} parent=1 // pred_check
      _
    $region15: #{tpu_custom_call.1} parent=1 // pred_check_branch
      %179 = sbr.rel (0) target = $region17
    $region16: #{tpu_custom_call.1} parent=1 // pred_region
      %180 = dma.done [#allocation4], 512
    $region17: #{tpu_custom_call.1} parent=1 // pred_fallthru
      _
    %181 = vsyncpa [#allocation3], 1
    %182 = vsyncpa [#allocation4], 1

</llo_original>
